<compile_context>
chip_gen: v6e
topology: v6e:2x2x1
jax: 0.10.0
libtpu: 0.0.40
codegen_flags: <defaults>
</compile_context>

<pallas_src>
import numpy as np
import jax
import jax.numpy as jnp
from jax.experimental import pallas as pl
from jax.experimental.pallas import tpu as pltpu


def _drop_path_kernel(scale_ref, x_ref, o_ref):
    # scale_ref: (ROWS, 1), same dtype as x; broadcast over the (ROWS, F_TILE)
    # tile.  Pure vld -> vmul -> vst stream, HBM-bandwidth bound.
    o_ref[...] = (x_ref[...] * scale_ref[...]).astype(o_ref.dtype)


def _round_up(n, m):
    return (n + m - 1) // m * m


# ~2 MiB per block: 4x (double-buffered input + output) ~= 8 MiB of VMEM,
# safe under v5e's 16 MiB default scoped limit and v7x's 32 MiB, while each
# step carries >= ~2.5 us of DMA on v5e (>> 0.35 us per-step overhead).
_TARGET_BLOCK_BYTES = 2 * 1024 * 1024
_SMALL_FAST_PATH_BYTES = 1 * 1024 * 1024


def _choose_block(B, F, itemsize):
    """Pick (ROWS, F_TILE) for a (B, F) elementwise stream."""
    rows_base = {4: 8, 2: 16, 1: 32}.get(itemsize, 8)
    f128 = _round_up(F, 128)
    row_bytes = f128 * itemsize
    min_rows = B if B <= rows_base else rows_base  # full-dim block allowed for tiny B

    if min_rows * row_bytes <= _TARGET_BLOCK_BYTES:
        # Whole (128-aligned) rows fit the budget: take full rows and grow
        # ROWS toward the target -> contiguous row-major DMA, 1-D-ish grid.
        f_tile = f128
        rows = min_rows
        if B > rows_base:
            rows_fit = max(1, _TARGET_BLOCK_BYTES // (row_bytes * rows_base)) * rows_base
            rows = min(rows_fit, _round_up(B, rows_base))
    else:
        # Row too long for one block: keep minimal sublane count, tile lanes.
        rows = min_rows
        lanes_fit = max(1, _TARGET_BLOCK_BYTES // (rows * itemsize * 128)) * 128
        f_tile = min(lanes_fit, f128)

    # v7x has 2 TensorCores sharing ~3.2 TB/s HBM: make sure there are at
    # least 2 grid steps along a "parallel" axis whenever we can split.
    gb = -(-B // rows)
    gf = -(-F // f_tile)
    if gb * gf < 2:
        if B > rows_base:
            rows = _round_up(-(-B // 2), rows_base)
        elif f128 > 128:
            f_tile = _round_up(-(-f128 // 2), 128)
    return rows, f_tile


def drop_path(x, drop_prob, *, key=None, seed=0, training=True,
              use_pallas=None, donate=False):
    """JAX/Pallas equivalent of DropPath.forward (any layout, batch-major)."""
    if not training or drop_prob == 0.0:
        return x
    if not jnp.issubdtype(x.dtype, jnp.floating):
        raise TypeError("drop_path expects a floating-point input "
                        f"(got {x.dtype}); integer scaling is unintended.")

    keep_prob = float(1.0 - drop_prob)
    B = x.shape[0]
    F = int(np.prod(x.shape[1:]))
    dt = x.dtype
    itemsize = jnp.dtype(dt).itemsize

    # Per-sample keep mask computed in the wrapper (hoisted off the
    # memory-bound inner loop).  Same floor(keep_prob + U[0,1)) trick as the
    # PyTorch module.
    # NOTE: thread a fresh `key` (or `seed`) every training step, otherwise
    # the identical mask is reused on every call.
    if key is None:
        key = jax.random.PRNGKey(seed)
    u = jax.random.uniform(key, (B,), dtype=jnp.float32)
    mask = jnp.floor(keep_prob + u)
    # Keep the multiply in x's dtype (bf16 stays bf16 on v6e/v7x; f32 stays
    # f32).  Mosaic inserts promotes where the VALU lacks the type (v5e).
    scale = (mask * (1.0 / keep_prob)).astype(dt)

    if use_pallas is None:
        use_pallas = (B * F * itemsize) >= _SMALL_FAST_PATH_BYTES
    if not use_pallas:
        # Tiny tensors: fixed pallas_call + pipeline overhead dominates;
        # a fused XLA multiply is faster and sidesteps single-step grids.
        bshape = (B,) + (1,) * (x.ndim - 1)
        return (x * scale.reshape(bshape)).astype(dt)

    rows, f_tile = _choose_block(B, F, itemsize)
    grid = (pl.cdiv(B, rows), pl.cdiv(F, f_tile))

    x2 = x.reshape(B, F)
    scale2 = scale.reshape(B, 1)

    out = pl.pallas_call(
        _drop_path_kernel,
        out_shape=jax.ShapeDtypeStruct((B, F), dt),
        grid=grid,
        in_specs=[
            pl.BlockSpec((rows, 1), lambda i, j: (i, 0)),       # per-row scale
            pl.BlockSpec((rows, f_tile), lambda i, j: (i, j)),  # activations
        ],
        out_specs=pl.BlockSpec((rows, f_tile), lambda i, j: (i, j)),
        compiler_params=pltpu.CompilerParams(
            dimension_semantics=("parallel", "parallel")),
        # Alias x -> out only when the caller promises x is dead afterwards.
        input_output_aliases=({1: 0} if donate else {}),
    )(scale2, x2)

    return out.reshape(x.shape)


if __name__ == "__main__":
    key = jax.random.PRNGKey(0)
    B, C, H, W = 2, 4, 16, 16
    x = jax.random.normal(key, (B, C, H, W), dtype=jnp.float32)

    drop_prob = 0.3
    keep_prob = 1.0 - drop_prob

    # Eval path must be identity (matches `if not self.training: return x`).
    y_eval = drop_path(x, drop_prob, training=False)
    assert jnp.array_equal(y_eval, x)

    # Training path through the Pallas kernel.  This tiny input would
    # normally take the fused-XLA fast path, so force the kernel here.
    mask_key = jax.random.PRNGKey(1234)
    y = drop_path(x, drop_prob, key=mask_key, training=True, use_pallas=True)
    y = jax.block_until_ready(y)

    # Auto path (small-input fast path) must agree with the kernel result.
    y_fast = drop_path(x, drop_prob, key=mask_key, training=True, use_pallas=False)
    np.testing.assert_allclose(np.asarray(y), np.asarray(y_fast),
                               rtol=1e-6, atol=1e-6)

    # Each sample must be either exactly zeroed or scaled by 1/keep_prob.
    for b in range(B):
        row = np.asarray(y[b])
        ref = np.asarray(x[b]) / keep_prob
        is_dropped = np.allclose(row, 0.0)
        is_kept = np.allclose(row, ref, rtol=1e-5, atol=1e-6)
        assert is_dropped or is_kept, f"sample {b} neither dropped nor scaled"

    print("KERNEL_OK")
</pallas_src>

<mosaic_0001>
module attributes {stable_mosaic.version = 11 : i64} {
  func.func @_drop_path_kernel(%arg0: i32, %arg1: i32, %arg2: memref<2x1xf32, #tpu.memory_space<vmem>>, %arg3: memref<2x512xf32, #tpu.memory_space<vmem>>, %arg4: memref<2x512xf32, #tpu.memory_space<vmem>>) attributes {dimension_semantics = [#tpu.dimension_semantics<parallel>, #tpu.dimension_semantics<parallel>], iteration_bounds = array<i64: 1, 2>, scalar_prefetch = 0 : i64, scratch_operands = 0 : i64, tpu.core_type = #tpu.core_type<tc>, window_params = [{transform_indices = @transform_0, window_bounds = array<i64: 2, 1>}, {transform_indices = @transform_1, window_bounds = array<i64: 2, 512>}, {transform_indices = @transform_2, window_bounds = array<i64: 2, 512>}]} {
    %c0 = arith.constant 0 : index
    %c0_0 = arith.constant 0 : index
    %0 = vector.load %arg3[%c0, %c0_0] : memref<2x512xf32, #tpu.memory_space<vmem>>, vector<2x512xf32>
    %c0_1 = arith.constant 0 : index
    %c0_2 = arith.constant 0 : index
    %1 = vector.load %arg2[%c0_1, %c0_2] : memref<2x1xf32, #tpu.memory_space<vmem>>, vector<2x1xf32>
    %2 = vector.broadcast %1 : vector<2x1xf32> to vector<2x512xf32>
    %3 = arith.mulf %0, %2 : vector<2x512xf32>
    %c0_3 = arith.constant 0 : index
    %c0_4 = arith.constant 0 : index
    %4 = vector.load %arg4[%c0_3, %c0_4] : memref<2x512xf32, #tpu.memory_space<vmem>>, vector<2x512xf32>
    tpu.vector_store %arg4[%c0_3, %c0_4], %3 {strides = array<i32>} : memref<2x512xf32, #tpu.memory_space<vmem>>, vector<2x512xf32>,
    return
  }
  func.func @transform_0(%arg0: i32, %arg1: i32) -> (i32, i32) {
    %c0_i32 = arith.constant 0 : i32
    %c0_i32_0 = arith.constant 0 : i32
    return %arg0, %c0_i32 : i32, i32
  }
  func.func @transform_1(%arg0: i32, %arg1: i32) -> (i32, i32) {
    %c0_i32 = arith.constant 0 : i32
    return %arg0, %arg1 : i32, i32
  }
  func.func @transform_2(%arg0: i32, %arg1: i32) -> (i32, i32) {
    %c0_i32 = arith.constant 0 : i32
    return %arg0, %arg1 : i32, i32
  }
}

</mosaic_0001>

<llo_original>
// kernel: tpu_custom_call.1
$region0: #{tpu_custom_call.1}
  #allocation0 [shape = 'u32[]', space=smem, size = 0x4, offset = 0x4, fixed_abs, tag = 'smem constant byte address 0x4 - core index']
  #allocation1 [shape = 'u32[144,128]{1,0:T(1,128)}', space=vmem, size = 0x12000, scoped, tag = 'internal scratch']
  %s0 = inlined_call_operand.vmem [shape: f32[2,1], index: 0, kind: input, shape index: {}]
  %s1 = inlined_call_operand.hbm [shape: f32[2,1024], index: 1, kind: input, shape index: {}]
  %s2 = inlined_call_operand.hbm [shape: f32[2,1024], index: 2, kind: output, shape index: {}]
  %s3 = sld [smem:[#allocation0]]
  $region45: #{tpu_custom_call.1} parent=0
    _
  %s5 = ssub.s32 1, %s3
  %s6 = scalar_select 0, %s5, %s3
  $region1: #{tpu_custom_call.1} parent=0
    #allocation2 [shape = 'u8[8192]{0}', space=vmem, size = 0x2000, scoped, tag = 'input window, operand 1']
    #allocation3 [shape = 's32[2]{0}', space=sflag, size = 0x8, scoped, tag = 'scoped memory for tpu_custom_call.1']
    #allocation4 [shape = 's32[2]{0}', space=sflag, size = 0x8, scoped, tag = 'scoped memory for tpu_custom_call.1']
    #allocation5 [shape = 'u8[8192]{0}', space=vmem, size = 0x2000, scoped, tag = 'output window, operand 0']
    %7 = vsyncpa [#allocation3], 0
    %s8 = scalar_lea.sflag [#allocation3], 1
    %9 = vsyncpa %s8, 0
    %10 = vsyncpa [#allocation4], 0
    %s11 = scalar_lea.sflag [#allocation4], 1
    %12 = vsyncpa %s11, 0
    loop: start=0, step=1, limit=4
    $region2: #{tpu_custom_call.1} parent=1 // loop_pre_header
      _
    $region3: #{tpu_custom_call.1} parent=1 // loop_header
      %s14 = sphi 0, %s18
      %p15 = scmp.ge.s32.totalorder %s14, 4
      %s21 = sphi 0, %s33
      %s22 = sphi 0, %s29
      %s23 = sphi 0, %s21
      %s24 = sphi 0, %s22
      %s25 = sphi 0, %s23
      %s26 = sphi 0, %s24
      %s36 = sphi 0, %s38
      %s39 = sphi 0, %s36
      %s40 = sphi 0, %s39
      %s56 = sphi 0, %s40
      %s64 = sphi 0, %s66
      %s67 = sphi 0, %s64
      %s68 = sphi 0, %s67
      %s84 = sphi 0, %s68
      %s92 = sphi 0, %s94
      %s95 = sphi 0, %s92
      %s96 = sphi 0, %s95
      %s112 = sphi 0, %s96
    $region4: #{tpu_custom_call.1} parent=1 // loop_header_branch
      %17 = sbr.rel (%p15) target = $region8
    $region5: #{tpu_custom_call.1} parent=1 // loop_body
      %s19 = ssub.s32 %s14, 1
      %s20 = ssub.s32 %s14, 2
      %s27 = sadd.s32 1, %s22
      %p28 = scmp.ge.s32.totalorder %s27, 2
      %s29 = scalar_select %p28, 0, %s27
      %s30 = sadd.s32 1, %s21
      %s31 = scalar_select %p28, %s30, %s21
      %p32 = scmp.ge.s32.totalorder %s31, 1
      %s33 = scalar_select %p32, 0, %s31
      %s34 = ssub.s32 %s21, %s33
      %p35 = scmp.eq.s32.totalorder %s34, 0
      %s37 = sadd.s32 %s36, 1
      %s38 = scalar_select %p35, %s36, %s37
      %p41 = pneg %p35
      %p42 = scmp.eq.s32.totalorder %s14, 1
      %p43 = por %p41, %p42
      %p44 = scmp.ne.s32.totalorder %s36, %s39
      %p45 = scmp.eq.s32.totalorder %s14, 0
      %p46 = por %p44, %p45
      %p47 = scmp.ne.s32.totalorder %s36, %s39
      %p48 = scmp.eq.s32.totalorder %s19, 1
      %p49 = por %p47, %p48
      %p50 = scmp.ne.s32.totalorder %s39, %s40
      %p51 = scmp.eq.s32.totalorder %s19, 0
      %p52 = por %p50, %p51
      %p53 = scmp.ne.s32.totalorder %s39, %s40
      %p54 = scmp.eq.s32.totalorder %s20, 1
      %p55 = por %p53, %p54
      %p57 = scmp.ne.s32.totalorder %s40, %s56
      %p58 = scmp.eq.s32.totalorder %s20, 0
      %p59 = por %p57, %p58
      %s60 = ssub.s32 %s21, %s33
      %s61 = ssub.s32 %s22, %s29
      %s62 = sor.u32 %s60, %s61
      %p63 = scmp.eq.s32.totalorder %s62, 0
      %s65 = sadd.s32 %s64, 1
      %s66 = scalar_select %p63, %s64, %s65
      %p69 = pneg %p63
      %p70 = scmp.eq.s32.totalorder %s14, 1
      %p71 = por %p69, %p70
      %p72 = scmp.ne.s32.totalorder %s64, %s67
      %p73 = scmp.eq.s32.totalorder %s14, 0
      %p74 = por %p72, %p73
      %p75 = scmp.ne.s32.totalorder %s64, %s67
      %p76 = scmp.eq.s32.totalorder %s19, 1
      %p77 = por %p75, %p76
      %p78 = scmp.ne.s32.totalorder %s67, %s68
      %p79 = scmp.eq.s32.totalorder %s19, 0
      %p80 = por %p78, %p79
      %p81 = scmp.ne.s32.totalorder %s67, %s68
      %p82 = scmp.eq.s32.totalorder %s20, 1
      %p83 = por %p81, %p82
      %p85 = scmp.ne.s32.totalorder %s68, %s84
      %p86 = scmp.eq.s32.totalorder %s20, 0
      %p87 = por %p85, %p86
      %s88 = ssub.s32 %s21, %s33
      %s89 = ssub.s32 %s22, %s29
      %s90 = sor.u32 %s88, %s89
      %p91 = scmp.eq.s32.totalorder %s90, 0
      %s93 = sadd.s32 %s92, 1
      %s94 = scalar_select %p91, %s92, %s93
      %p97 = pneg %p91
      %p98 = scmp.eq.s32.totalorder %s14, 1
      %p99 = por %p97, %p98
      %p100 = scmp.ne.s32.totalorder %s92, %s95
      %p101 = scmp.eq.s32.totalorder %s14, 0
      %p102 = por %p100, %p101
      %p103 = scmp.ne.s32.totalorder %s92, %s95
      %p104 = scmp.eq.s32.totalorder %s19, 1
      %p105 = por %p103, %p104
      %p106 = scmp.ne.s32.totalorder %s95, %s96
      %p107 = scmp.eq.s32.totalorder %s19, 0
      %p108 = por %p106, %p107
      %p109 = scmp.ne.s32.totalorder %s95, %s96
      %p110 = scmp.eq.s32.totalorder %s20, 1
      %p111 = por %p109, %p110
      %p113 = scmp.ne.s32.totalorder %s96, %s112
      %p114 = scmp.eq.s32.totalorder %s20, 0
      %p115 = por %p113, %p114
      %p116 = scmp.le.s32.totalorder 1, %s14
      %p117 = scmp.lt.s32.totalorder %s14, 3
      %p118 = pnand %p116, %p117
      %p119 = pneg %p118
      // Predicated region
      $region9: #{tpu_custom_call.1} parent=5 // pred_check
        _
      $region10: #{tpu_custom_call.1} parent=5 // pred_check_branch
        %121 = sbr.rel (%p118) target = $region12
      $region11: #{tpu_custom_call.1} parent=5 // pred_region
        %s122 = ssub.s32 %s14, 1
        // Predicated region
        $region13: #{tpu_custom_call.1} parent=11 // pred_check
          %p123 = pneg %p52
        $region14: #{tpu_custom_call.1} parent=11 // pred_check_branch
          %125 = sbr.rel (%p123) target = $region16
        $region15: #{tpu_custom_call.1} parent=11 // pred_region
          %p126 = scmp.lt.s32.totalorder %s23, 0
          %s127 = scalar_select %p126, %s23, 0
          %s128 = smul.addr %s127, 2
          %s129 = scalar_lea.vmem %s0, %s128
        $region16: #{tpu_custom_call.1} parent=11 // pred_fallthru
          _
      $region12: #{tpu_custom_call.1} parent=5 // pred_fallthru
        _
      %p130 = scmp.lt.s32.totalorder %s14, 2
      // Predicated region
      $region17: #{tpu_custom_call.1} parent=5 // pred_check
        %p131 = pneg %p130
      $region18: #{tpu_custom_call.1} parent=5 // pred_check_branch
        %133 = sbr.rel (%p131) target = $region20
      $region19: #{tpu_custom_call.1} parent=5 // pred_region
        // Predicated region
        $region21: #{tpu_custom_call.1} parent=19 // pred_check
          %p134 = pneg %p74
        $region22: #{tpu_custom_call.1} parent=19 // pred_check_branch
          %136 = sbr.rel (%p134) target = $region24
        $region23: #{tpu_custom_call.1} parent=19 // pred_region
          %s137 = sand.u32 %s64, 1
          %s138 = scalar_lea.sflag [#allocation3], %s137
          %s139 = sand.u32 %s64, 1
          %s140 = smul.addr %s139, 8
          %s141 = scalar_lea.vmem [#allocation2], %s140
          %s142 = smul.u32 4, %s22
          %s144 = ssub.s32 128, 128
          %145 = vsyncadd %s138, %s144
          %s146 = smul.addr %s21, 8
          %s147 = sadd.s32 %s142, %s146
          %s148 = smul.addr %s147, 32
          %s149 = scalar_lea.hbm %s1, %s148
          %s151 = sshll.u32 %s141, 4
          %s152 = int_to_ptr.vmem [resolvable:$true] %s151
          %154 = dma.hbm_to_vmem [thread:$0]  %s149, 128, %s152, %s138
        $region24: #{tpu_custom_call.1} parent=19 // pred_fallthru
          _
      $region20: #{tpu_custom_call.1} parent=5 // pred_fallthru
        _
      %p155 = scmp.le.s32.totalorder 1, %s14
      %p156 = scmp.lt.s32.totalorder %s14, 3
      %p157 = pnand %p155, %p156
      %p158 = pneg %p157
      // Predicated region
      $region25: #{tpu_custom_call.1} parent=5 // pred_check
        _
      $region26: #{tpu_custom_call.1} parent=5 // pred_check_branch
        %160 = sbr.rel (%p157) target = $region28
      $region27: #{tpu_custom_call.1} parent=5 // pred_region
        %s161 = ssub.s32 %s14, 1
        %s162 = sand.u32 %s67, 1
        %s163 = scalar_lea.sflag [#allocation3], %s162
        %s164 = sand.u32 %s67, 1
        %s165 = smul.addr %s164, 8
        %s166 = scalar_lea.vmem [#allocation2], %s165
        // Predicated region
        $region29: #{tpu_custom_call.1} parent=27 // pred_check
          %p167 = pneg %p80
        $region30: #{tpu_custom_call.1} parent=27 // pred_check_branch
          %169 = sbr.rel (%p167) target = $region32
        $region31: #{tpu_custom_call.1} parent=27 // pred_region
          %170 = dma.done %s163, 128
        $region32: #{tpu_custom_call.1} parent=27 // pred_fallthru
          _
        %p171 = scmp.lt.s32.totalorder %s23, 0
        %s172 = scalar_select %p171, %s23, 0
        %s173 = smul.addr %s172, 2
        %s174 = scalar_lea.vmem %s0, %s173
        %p175 = pneg %p52
        %p176 = pneg %p49
        %s177 = sand.u32 %s67, 1
        %s178 = scalar_lea.sflag [#allocation3], %s177
        %s179 = sand.u32 %s67, 1
        %s180 = smul.addr %s179, 8
        %s181 = scalar_lea.vmem [#allocation2], %s180
        %p182 = pneg %p80
        %p183 = pneg %p77
        %p184 = pneg %p108
        %p185 = pneg %p105
        %s186 = sand.u32 %s95, 1
        %s187 = scalar_lea.sflag [#allocation4], %s186
        %s188 = sand.u32 %s95, 1
        %s189 = smul.addr %s188, 8
        %s190 = scalar_lea.vmem [#allocation5], %s189
        %p191 = scmp.lt.s32.totalorder %s23, 0
        %s192 = scalar_select %p191, %s23, 0
        %s193 = smul.addr %s192, 2
        %s194 = scalar_lea.vmem %s0, %s193
        %s195 = smul.u32 4, %s24
        %s196 = smul.u32 4, %s24
        %v197 = vld [vmem:[%s166] sm:$0xff]
        %v198 = vld [vmem:[%s194] sm:$0x3]
        %200 = vset.pattern.permute.xlu0 0
        %201 = vperm.xlu0 %200, %v198
        %v202 = vpop.permute.xlu0 %201
        %v204 = vunpack.c.l.s4 269488144
        %v205 = vunpack.c.0.s8 %v204
        %v206 = vlaneseq
        %v207 = vshrl.u32 %v206, 7
        %v208 = vsub.s32 %v205, %v207
        %v209 = vrot.slane %v202, %v208
        %v211 = vmul.f32 %v197, %v209
        %212 = vst [vmem:[%s190] sm:$0xff] %v211
        %s213 = sand.u32 %s95, 1
        %s214 = scalar_lea.sflag [#allocation4], %s213
        %s215 = sand.u32 %s95, 1
        %s216 = smul.addr %s215, 8
        %s217 = scalar_lea.vmem [#allocation5], %s216
        // Predicated region
        $region33: #{tpu_custom_call.1} parent=27 // pred_check
          %p218 = pneg %p105
        $region34: #{tpu_custom_call.1} parent=27 // pred_check_branch
          %220 = sbr.rel (%p218) target = $region36
        $region35: #{tpu_custom_call.1} parent=27 // pred_region
          %s221 = smul.u32 4, %s24
          %s223 = ssub.s32 128, 128
          %224 = vsyncadd %s214, %s223
          %s225 = smul.addr %s23, 8
          %s226 = sadd.s32 %s221, %s225
          %s227 = smul.addr %s226, 32
          %s228 = scalar_lea.hbm %s2, %s227
          %s230 = sshll.u32 %s217, 4
          %s231 = int_to_ptr.vmem [resolvable:$true] %s230
          %233 = dma.vmem_to_hbm [thread:$0]  %s231, 128, %s228, %s214
        $region36: #{tpu_custom_call.1} parent=27 // pred_fallthru
          _
      $region28: #{tpu_custom_call.1} parent=5 // pred_fallthru
        _
      %p234 = scmp.le.s32.totalorder 2, %s14
      // Predicated region
      $region37: #{tpu_custom_call.1} parent=5 // pred_check
        %p235 = pneg %p234
      $region38: #{tpu_custom_call.1} parent=5 // pred_check_branch
        %237 = sbr.rel (%p235) target = $region40
      $region39: #{tpu_custom_call.1} parent=5 // pred_region
        %s238 = ssub.s32 %s14, 2
        // Predicated region
        $region41: #{tpu_custom_call.1} parent=39 // pred_check
          %p239 = pneg %p111
        $region42: #{tpu_custom_call.1} parent=39 // pred_check_branch
          %241 = sbr.rel (%p239) target = $region44
        $region43: #{tpu_custom_call.1} parent=39 // pred_region
          %s242 = sand.u32 %s96, 1
          %s243 = scalar_lea.sflag [#allocation4], %s242
          %s244 = sand.u32 %s96, 1
          %s245 = smul.addr %s244, 8
          %s246 = scalar_lea.vmem [#allocation5], %s245
          %247 = dma.done %s243, 128
        $region44: #{tpu_custom_call.1} parent=39 // pred_fallthru
          _
      $region40: #{tpu_custom_call.1} parent=5 // pred_fallthru
        _
    $region6: #{tpu_custom_call.1} parent=1 // loop_footer
      %s18 = sadd.s32 1, %s14
    $region7: #{tpu_custom_call.1} parent=1 // loop_footer_branch
      %13 = sbr.rel target = $region3
    $region8: #{tpu_custom_call.1} parent=1 // loop_exit
      _
    %248 = vsyncpa [#allocation3], 1
    %s249 = scalar_lea.sflag [#allocation3], 1
    %250 = vsyncpa %s249, 1
    %251 = vsyncpa [#allocation4], 1
    %s252 = scalar_lea.sflag [#allocation4], 1
    %253 = vsyncpa %s252, 1

</llo_original>
